<compile_context>
chip_gen: v7x
topology: tpu7x:2x2x1
jax: 0.10.0
libtpu: 0.0.40
codegen_flags: <defaults>
</compile_context>

<pallas_src>
import jax
import jax.numpy as jnp
from jax.experimental import pallas as pl
from jax.experimental.pallas import tpu as pltpu


def _round_up(x, m):
    return ((x + m - 1) // m) * m


def _mf_kernel(uid_ref, iid_ref, utab_ref, itab_ref, out_ref):
    # uid_ref / iid_ref : (1, TB)  int32 — batch ids in the lane dimension
    # utab_ref          : (F_aug_p, n_users_p)  f32 augmented user table
    # itab_ref          : (F_aug_p, n_items_p)  f32 augmented item table
    # out_ref           : (1, TB)  f32 predictions
    n_users = utab_ref.shape[1]
    n_items = itab_ref.shape[1]
    tb = out_ref.shape[1]

    # One-hot gather on the MXU: onehot[r, b] = (r == id[b]).
    u_oh = (jax.lax.broadcasted_iota(jnp.int32, (n_users, tb), 0)
            == uid_ref[...]).astype(jnp.float32)
    i_oh = (jax.lax.broadcasted_iota(jnp.int32, (n_items, tb), 0)
            == iid_ref[...]).astype(jnp.float32)
    u = jnp.dot(utab_ref[...], u_oh, preferred_element_type=jnp.float32)  # (F_aug, TB)
    v = jnp.dot(itab_ref[...], i_oh, preferred_element_type=jnp.float32)  # (F_aug, TB)

    # Factor axis sits on sublanes -> cheap sublane reduce.  Biases (and the
    # global bias) are folded into the augmented table rows, so this single
    # reduce is the whole score.
    logit = jnp.sum(u * v, axis=0, keepdims=True)                         # (1, TB)

    # sigmoid: exp on the EUP, divide replaced by approx reciprocal (also EUP).
    out_ref[...] = pl.reciprocal(1.0 + jnp.exp(-logit), approx=True)


def matrix_factorization_forward(user_id, item_id, params, *, max_tile=512):
    """Fused gather + MF scoring. Returns sigmoid scores of shape (B,)."""
    user_emb = params["user_embedding"]     # (n_users, F) f32
    item_emb = params["item_embedding"]     # (n_items, F) f32
    user_bias = params["user_bias"]         # (n_users, 1) f32
    item_bias = params["item_bias"]         # (n_items, 1) f32
    global_bias = params["global_bias"]     # (1,) f32

    n_users, n_factors = user_emb.shape
    n_items, _ = item_emb.shape
    batch = user_id.shape[0]

    # --- Augmented, transposed, lane-padded tables (tiny; one-time XLA glue). ---
    f_aug = n_factors + 2
    f_aug_p = _round_up(f_aug, 8)          # sublane multiple
    n_users_p = _round_up(n_users, 128)    # lane multiple
    n_items_p = _round_up(n_items, 128)

    u_rows = jnp.concatenate(
        [user_emb.T,                                      # (F, n_users)
         user_bias.T + global_bias[0],                    # user_bias + global_bias
         jnp.ones((1, n_users), jnp.float32)], axis=0)    # pairs with item_bias row
    i_rows = jnp.concatenate(
        [item_emb.T,
         jnp.ones((1, n_items), jnp.float32),             # pairs with user_bias row
         item_bias.T], axis=0)

    u_tab = jnp.zeros((f_aug_p, n_users_p), jnp.float32).at[:f_aug, :n_users].set(u_rows)
    i_tab = jnp.zeros((f_aug_p, n_items_p), jnp.float32).at[:f_aug, :n_items].set(i_rows)

    # --- Batch tiling: lane-dense tiles of TB ids, padded with (valid) id 0. ---
    tb = max_tile if batch > max_tile else _round_up(max(batch, 1), 128)
    b_pad = _round_up(batch, tb)
    uid = jnp.pad(user_id.astype(jnp.int32), (0, b_pad - batch)).reshape(1, b_pad)
    iid = jnp.pad(item_id.astype(jnp.int32), (0, b_pad - batch)).reshape(1, b_pad)

    out = pl.pallas_call(
        _mf_kernel,
        out_shape=jax.ShapeDtypeStruct((1, b_pad), jnp.float32),
        grid_spec=pltpu.PrefetchScalarGridSpec(
            num_scalar_prefetch=0,
            grid=(b_pad // tb,),
            in_specs=[
                pl.BlockSpec((1, tb), lambda b: (0, b)),
                pl.BlockSpec((1, tb), lambda b: (0, b)),
                # Whole tables resident in VMEM; constant block index so they
                # are fetched once, not re-DMA'd every grid step.
                pl.BlockSpec((f_aug_p, n_users_p), lambda b: (0, 0)),
                pl.BlockSpec((f_aug_p, n_items_p), lambda b: (0, 0)),
            ],
            out_specs=pl.BlockSpec((1, tb), lambda b: (0, b)),
        ),
        compiler_params=pltpu.CompilerParams(
            dimension_semantics=("parallel",)),   # dual-TC sharding on v7x
    )(uid, iid, u_tab, i_tab)
    return out[0, :batch]


def reference_forward(user_id, item_id, params):
    u = params["user_embedding"][user_id]
    v = params["item_embedding"][item_id]
    logits = ((u * v).sum(axis=1)
              + params["user_bias"][user_id, 0]
              + params["item_bias"][item_id, 0]
              + params["global_bias"][0])
    return jax.nn.sigmoid(logits)


def init_params(key, n_users, n_items, n_factors):
    k_u, k_i = jax.random.split(key)
    return {
        # nn.init.normal_(std=0.1)
        "user_embedding": 0.1 * jax.random.normal(k_u, (n_users, n_factors), jnp.float32),
        "item_embedding": 0.1 * jax.random.normal(k_i, (n_items, n_factors), jnp.float32),
        # nn.init.zeros_
        "user_bias": jnp.zeros((n_users, 1), jnp.float32),
        "item_bias": jnp.zeros((n_items, 1), jnp.float32),
        # nn.Parameter(torch.zeros(1))
        "global_bias": jnp.zeros((1,), jnp.float32),
    }


if __name__ == "__main__":
    n_users, n_items, n_factors = 16, 32, 32
    batch = 8

    key = jax.random.PRNGKey(0)
    k_params, k_uid, k_iid, k_ub, k_ib = jax.random.split(key, 5)
    params = init_params(k_params, n_users, n_items, n_factors)

    user_id = jax.random.randint(k_uid, (batch,), 0, n_users, dtype=jnp.int32)
    item_id = jax.random.randint(k_iid, (batch,), 0, n_items, dtype=jnp.int32)

    pred = matrix_factorization_forward(user_id, item_id, params)
    jax.block_until_ready(pred)
    assert pred.shape == (batch,)

    # Tolerance covers the approximate-EUP reciprocal and a possible
    # reduced-precision (bf16-pass) MXU f32 path for the in-kernel one-hot
    # gather on some generations; typical error is << 1e-4.
    ref = reference_forward(user_id, item_id, params)
    assert jnp.allclose(pred, ref, atol=2e-3, rtol=0.0)

    # Second check with non-zero biases so the bias-folding path is exercised
    # (the faithful PyTorch init zero-initialises all biases).
    params_nz = dict(params)
    params_nz["user_bias"] = 0.1 * jax.random.normal(k_ub, (n_users, 1), jnp.float32)
    params_nz["item_bias"] = 0.1 * jax.random.normal(k_ib, (n_items, 1), jnp.float32)
    params_nz["global_bias"] = jnp.array([0.25], jnp.float32)
    pred_nz = matrix_factorization_forward(user_id, item_id, params_nz)
    jax.block_until_ready(pred_nz)
    ref_nz = reference_forward(user_id, item_id, params_nz)
    assert jnp.allclose(pred_nz, ref_nz, atol=2e-3, rtol=0.0)

    print("KERNEL_OK")
</pallas_src>

<mosaic_0001>
module attributes {stable_mosaic.version = 11 : i64} {
  func.func @_mf_kernel(%arg0: i32, %arg1: memref<1x128xi32, #tpu.memory_space<vmem>>, %arg2: memref<1x128xi32, #tpu.memory_space<vmem>>, %arg3: memref<40x128xf32, #tpu.memory_space<vmem>>, %arg4: memref<40x128xf32, #tpu.memory_space<vmem>>, %arg5: memref<1x128xf32, #tpu.memory_space<vmem>>) attributes {dimension_semantics = [#tpu.dimension_semantics<parallel>], iteration_bounds = array<i64: 1>, scalar_prefetch = 0 : i64, scratch_operands = 0 : i64, tpu.core_type = #tpu.core_type<tc>, window_params = [{transform_indices = @transform_0, window_bounds = array<i64: 1, 128>}, {transform_indices = @transform_1, window_bounds = array<i64: 1, 128>}, {pipeline_mode = #tpu.pipeline_mode<synchronous>, transform_indices = @transform_2, window_bounds = array<i64: 40, 128>}, {pipeline_mode = #tpu.pipeline_mode<synchronous>, transform_indices = @transform_3, window_bounds = array<i64: 40, 128>}, {transform_indices = @transform_4, window_bounds = array<i64: 1, 128>}]} {
    %0 = tpu.iota {dimensions = array<i32: 0>} : vector<128x128xi32>
    %c0 = arith.constant 0 : index
    %c0_0 = arith.constant 0 : index
    %1 = vector.load %arg1[%c0, %c0_0] : memref<1x128xi32, #tpu.memory_space<vmem>>, vector<1x128xi32>
    %2 = vector.broadcast %1 : vector<1x128xi32> to vector<128x128xi32>
    %3 = arith.cmpi eq, %0, %2 : vector<128x128xi32>
    %4 = arith.extui %3 : vector<128x128xi1> to vector<128x128xi32>
    %5 = arith.sitofp %4 : vector<128x128xi32> to vector<128x128xf32>
    %6 = tpu.iota {dimensions = array<i32: 0>} : vector<128x128xi32>
    %c0_1 = arith.constant 0 : index
    %c0_2 = arith.constant 0 : index
    %7 = vector.load %arg2[%c0_1, %c0_2] : memref<1x128xi32, #tpu.memory_space<vmem>>, vector<1x128xi32>
    %8 = vector.broadcast %7 : vector<1x128xi32> to vector<128x128xi32>
    %9 = arith.cmpi eq, %6, %8 : vector<128x128xi32>
    %10 = arith.extui %9 : vector<128x128xi1> to vector<128x128xi32>
    %11 = arith.sitofp %10 : vector<128x128xi32> to vector<128x128xf32>
    %c0_3 = arith.constant 0 : index
    %c0_4 = arith.constant 0 : index
    %12 = vector.load %arg3[%c0_3, %c0_4] : memref<40x128xf32, #tpu.memory_space<vmem>>, vector<40x128xf32>
    %cst = arith.constant dense<0.000000e+00> : vector<40x128xf32>
    %13 = tpu.matmul %12, %5, %cst {dimension_numbers = #tpu.dot_dimension_numbers<[1], [0], [0], [1], [0, 0, 1, 1], [], []>} : vector<40x128xf32>, vector<128x128xf32>, vector<40x128xf32> -> vector<40x128xf32>
    %c0_5 = arith.constant 0 : index
    %c0_6 = arith.constant 0 : index
    %14 = vector.load %arg4[%c0_5, %c0_6] : memref<40x128xf32, #tpu.memory_space<vmem>>, vector<40x128xf32>
    %cst_7 = arith.constant dense<0.000000e+00> : vector<40x128xf32>
    %15 = tpu.matmul %14, %11, %cst_7 {dimension_numbers = #tpu.dot_dimension_numbers<[1], [0], [0], [1], [0, 0, 1, 1], [], []>} : vector<40x128xf32>, vector<128x128xf32>, vector<40x128xf32> -> vector<40x128xf32>
    %16 = arith.mulf %13, %15 : vector<40x128xf32>
    %cst_8 = arith.constant dense<0.000000e+00> : vector<128xf32>
    %17 = vector.multi_reduction <add>, %16, %cst_8 [0] : vector<40x128xf32> to vector<128xf32>
    %18 = vector.shape_cast %17 : vector<128xf32> to vector<1x128xf32>
    %cst_9 = arith.constant 0.000000e+00 : f32
    %19 = vector.broadcast %cst_9 : f32 to vector<1x128xf32>
    %20 = arith.subf %19, %18 : vector<1x128xf32>
    %21 = math.exp %20 : vector<1x128xf32>
    %cst_10 = arith.constant 1.000000e+00 : f32
    %22 = vector.broadcast %cst_10 : f32 to vector<1x128xf32>
    %23 = arith.addf %22, %21 : vector<1x128xf32>
    %24 = tpu.reciprocal %23 {approx = true} : vector<1x128xf32> -> vector<1x128xf32>
    %c0_11 = arith.constant 0 : index
    %c0_12 = arith.constant 0 : index
    %25 = vector.load %arg5[%c0_11, %c0_12] : memref<1x128xf32, #tpu.memory_space<vmem>>, vector<1x128xf32>
    tpu.vector_store %arg5[%c0_11, %c0_12], %24 {strides = array<i32>} : memref<1x128xf32, #tpu.memory_space<vmem>>, vector<1x128xf32>,
    return
  }
  func.func @transform_0(%arg0: i32) -> (i32, i32) {
    %c0_i32 = arith.constant 0 : i32
    %c0_i32_0 = arith.constant 0 : i32
    return %c0_i32, %arg0 : i32, i32
  }
  func.func @transform_1(%arg0: i32) -> (i32, i32) {
    %c0_i32 = arith.constant 0 : i32
    %c0_i32_0 = arith.constant 0 : i32
    return %c0_i32, %arg0 : i32, i32
  }
  func.func @transform_2(%arg0: i32) -> (i32, i32) {
    %c0_i32 = arith.constant 0 : i32
    %c0_i32_0 = arith.constant 0 : i32
    %c0_i32_1 = arith.constant 0 : i32
    return %c0_i32, %c0_i32_0 : i32, i32
  }
  func.func @transform_3(%arg0: i32) -> (i32, i32) {
    %c0_i32 = arith.constant 0 : i32
    %c0_i32_0 = arith.constant 0 : i32
    %c0_i32_1 = arith.constant 0 : i32
    return %c0_i32, %c0_i32_0 : i32, i32
  }
  func.func @transform_4(%arg0: i32) -> (i32, i32) {
    %c0_i32 = arith.constant 0 : i32
    %c0_i32_0 = arith.constant 0 : i32
    return %c0_i32, %arg0 : i32, i32
  }
}

</mosaic_0001>

<llo_original>
// kernel: tpu_custom_call.1
$region0: #{tpu_custom_call.1}
  #allocation0 [shape = 'u32[]', space=smem, size = 0x4, offset = 0x4, fixed_abs, tag = 'smem constant byte address 0x4 - core index']
  #allocation1 [shape = 'u32[144,128]{1,0:T(1,128)}', space=vmem, size = 0x12000, scoped, tag = 'internal scratch']
  %s0 = inlined_call_operand.hbm [shape: s32[1,128], index: 0, kind: input, shape index: {}]
  %s1 = inlined_call_operand.vmem [shape: s32[1,128], index: 1, kind: input, shape index: {}]
  %s2 = inlined_call_operand.hbm [shape: f32[40,128], index: 2, kind: input, shape index: {}]
  %s3 = inlined_call_operand.hbm [shape: f32[40,128], index: 3, kind: input, shape index: {}]
  %s4 = inlined_call_operand.hbm [shape: f32[1,128], index: 4, kind: output, shape index: {}]
  %s5 = sld [smem:[#allocation0]]
  $region38: #{tpu_custom_call.1} parent=0
    _
  %s7 = ssub.s32 1, %s5
  %s8 = scalar_select 0, %s7, %s5
  $region1: #{tpu_custom_call.1} parent=0
    #allocation2 [shape = 'u8[512]{0}', space=vmem, size = 0x400, scoped, tag = 'input window, operand 0, single buffered']
    #allocation3 [shape = 's32[1]{0}', space=sflag, size = 0x4, scoped, tag = 'scoped memory for tpu_custom_call.1']
    #allocation4 [shape = 's32[1]{0}', space=sflag, size = 0x4, scoped, tag = 'scoped memory for tpu_custom_call.1']
    #allocation5 [shape = 'u8[20480]{0}', space=vmem, size = 0x5000, scoped, tag = 'input window, operand 2, single buffered']
    #allocation6 [shape = 's32[1]{0}', space=sflag, size = 0x4, scoped, tag = 'scoped memory for tpu_custom_call.1']
    #allocation7 [shape = 'u8[20480]{0}', space=vmem, size = 0x5000, scoped, tag = 'input window, operand 3, single buffered']
    #allocation8 [shape = 'u8[512]{0}', space=vmem, size = 0x400, scoped, tag = 'output window, operand 0, single buffered']
    %9 = vsyncpa [#allocation3], 0
    %10 = vsyncpa [#allocation6], 0
    %11 = vsyncpa [#allocation4], 0
    // Predicated region
    $region2: #{tpu_custom_call.1} parent=1 // pred_check
      _
    $region3: #{tpu_custom_call.1} parent=1 // pred_check_branch
      %13 = sbr.rel (0) target = $region5
    $region4: #{tpu_custom_call.1} parent=1 // pred_region
      %s15 = ssub.s32 16, 16
      %16 = vsyncadd [#allocation3], %s15
      %s18 = sshll.u32 [#allocation2], 4
      %s19 = int_to_ptr.vmem [resolvable:$true] %s18
      %21 = dma.hbm_to_vmem [thread:$0]  %s0, 16, %s19, [#allocation3]
    $region5: #{tpu_custom_call.1} parent=1 // pred_fallthru
      _
    // Predicated region
    $region6: #{tpu_custom_call.1} parent=1 // pred_check
      _
    $region7: #{tpu_custom_call.1} parent=1 // pred_check_branch
      %23 = sbr.rel (0) target = $region9
    $region8: #{tpu_custom_call.1} parent=1 // pred_region
      _
    $region9: #{tpu_custom_call.1} parent=1 // pred_fallthru
      _
    // Predicated region
    $region10: #{tpu_custom_call.1} parent=1 // pred_check
      _
    $region11: #{tpu_custom_call.1} parent=1 // pred_check_branch
      %25 = sbr.rel (0) target = $region13
    $region12: #{tpu_custom_call.1} parent=1 // pred_region
      %s27 = ssub.s32 640, 640
      %28 = vsyncadd [#allocation6], %s27
      %s29 = sshll.u32 [#allocation5], 4
      %s30 = int_to_ptr.vmem [resolvable:$true] %s29
      %35 = dma.hbm_to_vmem [thread:$0]  %s2, 640, %s30, [#allocation6], 128, 128, 8
    $region13: #{tpu_custom_call.1} parent=1 // pred_fallthru
      _
    // Predicated region
    $region14: #{tpu_custom_call.1} parent=1 // pred_check
      _
    $region15: #{tpu_custom_call.1} parent=1 // pred_check_branch
      %37 = sbr.rel (0) target = $region17
    $region16: #{tpu_custom_call.1} parent=1 // pred_region
      %s39 = ssub.s32 640, 640
      %40 = vsyncadd [#allocation6], %s39
      %s41 = sshll.u32 [#allocation7], 4
      %s42 = int_to_ptr.vmem [resolvable:$true] %s41
      %47 = dma.hbm_to_vmem [thread:$0]  %s3, 640, %s42, [#allocation6], 128, 128, 8
    $region17: #{tpu_custom_call.1} parent=1 // pred_fallthru
      _
    // Predicated region
    $region18: #{tpu_custom_call.1} parent=1 // pred_check
      _
    $region19: #{tpu_custom_call.1} parent=1 // pred_check_branch
      %49 = sbr.rel (0) target = $region21
    $region20: #{tpu_custom_call.1} parent=1 // pred_region
      %50 = dma.done [#allocation3], 16
    $region21: #{tpu_custom_call.1} parent=1 // pred_fallthru
      _
    // Predicated region
    $region22: #{tpu_custom_call.1} parent=1 // pred_check
      _
    $region23: #{tpu_custom_call.1} parent=1 // pred_check_branch
      %52 = sbr.rel (0) target = $region25
    $region24: #{tpu_custom_call.1} parent=1 // pred_region
      %53 = dma.done [#allocation6], 640
    $region25: #{tpu_custom_call.1} parent=1 // pred_fallthru
      _
    // Predicated region
    $region26: #{tpu_custom_call.1} parent=1 // pred_check
      _
    $region27: #{tpu_custom_call.1} parent=1 // pred_check_branch
      %55 = sbr.rel (0) target = $region29
    $region28: #{tpu_custom_call.1} parent=1 // pred_region
      %56 = dma.done [#allocation6], 640
    $region29: #{tpu_custom_call.1} parent=1 // pred_fallthru
      _
    %v57 = vlaneseq
    %v58 = vshrl.u32 %v57, 7
    %v59 = vadd.s32 %v58, 8
    %v60 = vadd.s32 %v58, 16
    %v61 = vadd.s32 %v58, 24
    %v62 = vadd.s32 %v58, 32
    %v63 = vadd.s32 %v58, 40
    %v64 = vadd.s32 %v58, 48
    %v65 = vadd.s32 %v58, 56
    %v66 = vadd.s32 %v58, 64
    %v67 = vadd.s32 %v58, 72
    %v68 = vadd.s32 %v58, 80
    %v69 = vadd.s32 %v58, 88
    %v70 = vadd.s32 %v58, 96
    %v71 = vadd.s32 %v58, 104
    %v72 = vadd.s32 %v58, 112
    %v73 = vadd.s32 %v58, 120
    %v74 = vld [vmem:[#allocation2] sm:$0x1]
    %v75 = vlaneseq
    %v76 = vshrl.u32 %v75, 7
    %v77 = vsub.s32 0, %v76
    %v78 = vrot.slane %v74, %v77
    %vm79 = vcmp.eq.s32.totalorder %v58, %v78
    %vm80 = vcmp.eq.s32.totalorder %v59, %v78
    %vm81 = vcmp.eq.s32.totalorder %v60, %v78
    %vm82 = vcmp.eq.s32.totalorder %v61, %v78
    %vm83 = vcmp.eq.s32.totalorder %v62, %v78
    %vm84 = vcmp.eq.s32.totalorder %v63, %v78
    %vm85 = vcmp.eq.s32.totalorder %v64, %v78
    %vm86 = vcmp.eq.s32.totalorder %v65, %v78
    %vm87 = vcmp.eq.s32.totalorder %v66, %v78
    %vm88 = vcmp.eq.s32.totalorder %v67, %v78
    %vm89 = vcmp.eq.s32.totalorder %v68, %v78
    %vm90 = vcmp.eq.s32.totalorder %v69, %v78
    %vm91 = vcmp.eq.s32.totalorder %v70, %v78
    %vm92 = vcmp.eq.s32.totalorder %v71, %v78
    %vm93 = vcmp.eq.s32.totalorder %v72, %v78
    %vm94 = vcmp.eq.s32.totalorder %v73, %v78
    %v95 = vsel %vm79, 1, 0
    %v96 = vsel %vm80, 1, 0
    %v97 = vsel %vm81, 1, 0
    %v98 = vsel %vm82, 1, 0
    %v99 = vsel %vm83, 1, 0
    %v100 = vsel %vm84, 1, 0
    %v101 = vsel %vm85, 1, 0
    %v102 = vsel %vm86, 1, 0
    %v103 = vsel %vm87, 1, 0
    %v104 = vsel %vm88, 1, 0
    %v105 = vsel %vm89, 1, 0
    %v106 = vsel %vm90, 1, 0
    %v107 = vsel %vm91, 1, 0
    %v108 = vsel %vm92, 1, 0
    %v109 = vsel %vm93, 1, 0
    %v110 = vsel %vm94, 1, 0
    %v111 = vcvt.s32.f32 %v95
    %v112 = vcvt.s32.f32 %v96
    %v113 = vcvt.s32.f32 %v97
    %v114 = vcvt.s32.f32 %v98
    %v115 = vcvt.s32.f32 %v99
    %v116 = vcvt.s32.f32 %v100
    %v117 = vcvt.s32.f32 %v101
    %v118 = vcvt.s32.f32 %v102
    %v119 = vcvt.s32.f32 %v103
    %v120 = vcvt.s32.f32 %v104
    %v121 = vcvt.s32.f32 %v105
    %v122 = vcvt.s32.f32 %v106
    %v123 = vcvt.s32.f32 %v107
    %v124 = vcvt.s32.f32 %v108
    %v125 = vcvt.s32.f32 %v109
    %v126 = vcvt.s32.f32 %v110
    %v127 = vld [vmem:[%s1] sm:$0x1]
    %v128 = vlaneseq
    %v129 = vshrl.u32 %v128, 7
    %v130 = vsub.s32 0, %v129
    %v131 = vrot.slane %v127, %v130
    %vm132 = vcmp.eq.s32.totalorder %v58, %v131
    %vm133 = vcmp.eq.s32.totalorder %v59, %v131
    %vm134 = vcmp.eq.s32.totalorder %v60, %v131
    %vm135 = vcmp.eq.s32.totalorder %v61, %v131
    %vm136 = vcmp.eq.s32.totalorder %v62, %v131
    %vm137 = vcmp.eq.s32.totalorder %v63, %v131
    %vm138 = vcmp.eq.s32.totalorder %v64, %v131
    %vm139 = vcmp.eq.s32.totalorder %v65, %v131
    %vm140 = vcmp.eq.s32.totalorder %v66, %v131
    %vm141 = vcmp.eq.s32.totalorder %v67, %v131
    %vm142 = vcmp.eq.s32.totalorder %v68, %v131
    %vm143 = vcmp.eq.s32.totalorder %v69, %v131
    %vm144 = vcmp.eq.s32.totalorder %v70, %v131
    %vm145 = vcmp.eq.s32.totalorder %v71, %v131
    %vm146 = vcmp.eq.s32.totalorder %v72, %v131
    %vm147 = vcmp.eq.s32.totalorder %v73, %v131
    %v148 = vsel %vm132, 1, 0
    %v149 = vsel %vm133, 1, 0
    %v150 = vsel %vm134, 1, 0
    %v151 = vsel %vm135, 1, 0
    %v152 = vsel %vm136, 1, 0
    %v153 = vsel %vm137, 1, 0
    %v154 = vsel %vm138, 1, 0
    %v155 = vsel %vm139, 1, 0
    %v156 = vsel %vm140, 1, 0
    %v157 = vsel %vm141, 1, 0
    %v158 = vsel %vm142, 1, 0
    %v159 = vsel %vm143, 1, 0
    %v160 = vsel %vm144, 1, 0
    %v161 = vsel %vm145, 1, 0
    %v162 = vsel %vm146, 1, 0
    %v163 = vsel %vm147, 1, 0
    %v164 = vcvt.s32.f32 %v148
    %v165 = vcvt.s32.f32 %v149
    %v166 = vcvt.s32.f32 %v150
    %v167 = vcvt.s32.f32 %v151
    %v168 = vcvt.s32.f32 %v152
    %v169 = vcvt.s32.f32 %v153
    %v170 = vcvt.s32.f32 %v154
    %v171 = vcvt.s32.f32 %v155
    %v172 = vcvt.s32.f32 %v156
    %v173 = vcvt.s32.f32 %v157
    %v174 = vcvt.s32.f32 %v158
    %v175 = vcvt.s32.f32 %v159
    %v176 = vcvt.s32.f32 %v160
    %v177 = vcvt.s32.f32 %v161
    %v178 = vcvt.s32.f32 %v162
    %v179 = vcvt.s32.f32 %v163
    %v180 = vld [vmem:[#allocation5] sm:$0xff]
    %v181 = vld [vmem:[#allocation5 + $0x8] sm:$0xff]
    %v182 = vld [vmem:[#allocation5 + $0x10] sm:$0xff]
    %v183 = vld [vmem:[#allocation5 + $0x18] sm:$0xff]
    %v184 = vld [vmem:[#allocation5 + $0x20] sm:$0xff]
    %185 = vmatprep.subr.mxu0 0.0
    %186 = vmatpush1.msra.mxu0 %v111
    %187 = vmatprep.subr.mxu0 0.0
    %188 = vmatpush1.msra.mxu0 %v112
    %189 = vmatprep.subr.mxu0 0.0
    %190 = vmatpush1.msra.mxu0 %v113
    %191 = vmatprep.subr.mxu0 0.0
    %192 = vmatpush1.msra.mxu0 %v114
    %193 = vmatprep.subr.mxu0 0.0
    %194 = vmatpush1.msra.mxu0 %v115
    %195 = vmatprep.subr.mxu0 0.0
    %196 = vmatpush1.msra.mxu0 %v116
    %197 = vmatprep.subr.mxu0 0.0
    %198 = vmatpush1.msra.mxu0 %v117
    %199 = vmatprep.subr.mxu0 0.0
    %200 = vmatpush1.msra.mxu0 %v118
    %201 = vmatprep.subr.mxu0 0.0
    %202 = vmatpush1.msra.mxu0 %v119
    %203 = vmatprep.subr.mxu0 0.0
    %204 = vmatpush1.msra.mxu0 %v120
    %205 = vmatprep.subr.mxu0 0.0
    %206 = vmatpush1.msra.mxu0 %v121
    %207 = vmatprep.subr.mxu0 0.0
    %208 = vmatpush1.msra.mxu0 %v122
    %209 = vmatprep.subr.mxu0 0.0
    %210 = vmatpush1.msra.mxu0 %v123
    %211 = vmatprep.subr.mxu0 0.0
    %212 = vmatpush1.msra.mxu0 %v124
    %213 = vmatprep.subr.mxu0 0.0
    %214 = vmatpush1.msra.mxu0 %v125
    %215 = vmatprep.subr.mxu0 0.0
    %216 = vmatpush1.msra.mxu0 %v126
    %217 = vmatprep.subr.mxu0 0.0
    %218 = vmatpush1.msra.mxu0 0.0
    %219 = vmatprep.subr.mxu0 0.0
    %220 = vmatpush1.msra.mxu0 0.0
    %221 = vmatprep.subr.mxu0 0.0
    %222 = vmatpush1.msra.mxu0 0.0
    %223 = vmatprep.subr.mxu0 0.0
    %224 = vmatpush1.msra.mxu0 0.0
    %225 = vmatprep.subr.mxu0 0.0
    %226 = vmatpush1.msra.mxu0 0.0
    %227 = vmatprep.subr.mxu0 0.0
    %228 = vmatpush1.msra.mxu0 0.0
    %229 = vmatprep.subr.mxu0 0.0
    %230 = vmatpush1.msra.mxu0 0.0
    %231 = vmatprep.subr.mxu0 0.0
    %232 = vmatpush1.msra.mxu0 0.0
    %233 = vmatprep.subr.mxu0 0.0
    %234 = vmatpush1.msra.mxu0 0.0
    %235 = vmatprep.subr.mxu0 0.0
    %236 = vmatpush1.msra.mxu0 0.0
    %237 = vmatprep.subr.mxu0 0.0
    %238 = vmatpush1.msra.mxu0 0.0
    %239 = vmatprep.subr.mxu0 0.0
    %240 = vmatpush1.msra.mxu0 0.0
    %241 = vmatprep.subr.mxu0 0.0
    %242 = vmatpush1.msra.mxu0 0.0
    %243 = vmatprep.subr.mxu0 0.0
    %244 = vmatpush1.msra.mxu0 0.0
    %245 = vmatprep.subr.mxu0 0.0
    %246 = vmatpush1.msra.mxu0 0.0
    %247 = vmatprep.subr.mxu0 0.0
    %248 = vmatpush1.msra.mxu0 0.0
    %249 = vmatprep.mubr.f32.mxu0 0.0
    %250 = vmatmul.mubr.f32.gmra.mrb[0].mxu0 %v180
    %v251 = vpop.f32.mrb[0].mxu0
    %v252 = vadd.f32 0.0, %v251
    %v253 = vpop.f32.mrb[0].mxu0
    %254 = vmatprep.mubr.f32.mxu0 0.0
    %255 = vmatmul.mubr.f32.gmra.mrb[0].mxu0 %v181
    %v256 = vpop.f32.mrb[0].mxu0
    %v257 = vadd.f32 0.0, %v256
    %v258 = vpop.f32.mrb[0].mxu0
    %259 = vmatprep.mubr.f32.mxu0 0.0
    %260 = vmatmul.mubr.f32.gmra.mrb[0].mxu0 %v182
    %v261 = vpop.f32.mrb[0].mxu0
    %v262 = vadd.f32 0.0, %v261
    %v263 = vpop.f32.mrb[0].mxu0
    %264 = vmatprep.mubr.f32.mxu0 0.0
    %265 = vmatmul.mubr.f32.gmra.mrb[0].mxu0 %v183
    %v266 = vpop.f32.mrb[0].mxu0
    %v267 = vadd.f32 0.0, %v266
    %v268 = vpop.f32.mrb[0].mxu0
    %269 = vmatprep.mubr.f32.mxu0 0.0
    %270 = vmatmul.mubr.f32.gmra.mrb[0].mxu0 %v184
    %v271 = vpop.f32.mrb[0].mxu0
    %v272 = vadd.f32 0.0, %v271
    %v273 = vpop.f32.mrb[0].mxu0
    %274 = vdwg.mxu0
    %v275 = vld [vmem:[#allocation7] sm:$0xff]
    %v276 = vld [vmem:[#allocation7 + $0x8] sm:$0xff]
    %v277 = vld [vmem:[#allocation7 + $0x10] sm:$0xff]
    %v278 = vld [vmem:[#allocation7 + $0x18] sm:$0xff]
    %v279 = vld [vmem:[#allocation7 + $0x20] sm:$0xff]
    %280 = vmatprep.subr.mxu0 0.0
    %281 = vmatpush1.msra.mxu0 %v164
    %282 = vmatprep.subr.mxu0 0.0
    %283 = vmatpush1.msra.mxu0 %v165
    %284 = vmatprep.subr.mxu0 0.0
    %285 = vmatpush1.msra.mxu0 %v166
    %286 = vmatprep.subr.mxu0 0.0
    %287 = vmatpush1.msra.mxu0 %v167
    %288 = vmatprep.subr.mxu0 0.0
    %289 = vmatpush1.msra.mxu0 %v168
    %290 = vmatprep.subr.mxu0 0.0
    %291 = vmatpush1.msra.mxu0 %v169
    %292 = vmatprep.subr.mxu0 0.0
    %293 = vmatpush1.msra.mxu0 %v170
    %294 = vmatprep.subr.mxu0 0.0
    %295 = vmatpush1.msra.mxu0 %v171
    %296 = vmatprep.subr.mxu0 0.0
    %297 = vmatpush1.msra.mxu0 %v172
    %298 = vmatprep.subr.mxu0 0.0
    %299 = vmatpush1.msra.mxu0 %v173
    %300 = vmatprep.subr.mxu0 0.0
    %301 = vmatpush1.msra.mxu0 %v174
    %302 = vmatprep.subr.mxu0 0.0
    %303 = vmatpush1.msra.mxu0 %v175
    %304 = vmatprep.subr.mxu0 0.0
    %305 = vmatpush1.msra.mxu0 %v176
    %306 = vmatprep.subr.mxu0 0.0
    %307 = vmatpush1.msra.mxu0 %v177
    %308 = vmatprep.subr.mxu0 0.0
    %309 = vmatpush1.msra.mxu0 %v178
    %310 = vmatprep.subr.mxu0 0.0
    %311 = vmatpush1.msra.mxu0 %v179
    %312 = vmatprep.subr.mxu0 0.0
    %313 = vmatpush1.msra.mxu0 0.0
    %314 = vmatprep.subr.mxu0 0.0
    %315 = vmatpush1.msra.mxu0 0.0
    %316 = vmatprep.subr.mxu0 0.0
    %317 = vmatpush1.msra.mxu0 0.0
    %318 = vmatprep.subr.mxu0 0.0
    %319 = vmatpush1.msra.mxu0 0.0
    %320 = vmatprep.subr.mxu0 0.0
    %321 = vmatpush1.msra.mxu0 0.0
    %322 = vmatprep.subr.mxu0 0.0
    %323 = vmatpush1.msra.mxu0 0.0
    %324 = vmatprep.subr.mxu0 0.0
    %325 = vmatpush1.msra.mxu0 0.0
    %326 = vmatprep.subr.mxu0 0.0
    %327 = vmatpush1.msra.mxu0 0.0
    %328 = vmatprep.subr.mxu0 0.0
    %329 = vmatpush1.msra.mxu0 0.0
    %330 = vmatprep.subr.mxu0 0.0
    %331 = vmatpush1.msra.mxu0 0.0
    %332 = vmatprep.subr.mxu0 0.0
    %333 = vmatpush1.msra.mxu0 0.0
    %334 = vmatprep.subr.mxu0 0.0
    %335 = vmatpush1.msra.mxu0 0.0
    %336 = vmatprep.subr.mxu0 0.0
    %337 = vmatpush1.msra.mxu0 0.0
    %338 = vmatprep.subr.mxu0 0.0
    %339 = vmatpush1.msra.mxu0 0.0
    %340 = vmatprep.subr.mxu0 0.0
    %341 = vmatpush1.msra.mxu0 0.0
    %342 = vmatprep.subr.mxu0 0.0
    %343 = vmatpush1.msra.mxu0 0.0
    %344 = vmatprep.mubr.f32.mxu0 0.0
    %345 = vmatmul.mubr.f32.gmra.mrb[0].mxu0 %v275
    %v346 = vpop.f32.mrb[0].mxu0
    %v347 = vadd.f32 0.0, %v346
    %v348 = vpop.f32.mrb[0].mxu0
    %349 = vmatprep.mubr.f32.mxu0 0.0
    %350 = vmatmul.mubr.f32.gmra.mrb[0].mxu0 %v276
    %v351 = vpop.f32.mrb[0].mxu0
    %v352 = vadd.f32 0.0, %v351
    %v353 = vpop.f32.mrb[0].mxu0
    %354 = vmatprep.mubr.f32.mxu0 0.0
    %355 = vmatmul.mubr.f32.gmra.mrb[0].mxu0 %v277
    %v356 = vpop.f32.mrb[0].mxu0
    %v357 = vadd.f32 0.0, %v356
    %v358 = vpop.f32.mrb[0].mxu0
    %359 = vmatprep.mubr.f32.mxu0 0.0
    %360 = vmatmul.mubr.f32.gmra.mrb[0].mxu0 %v278
    %v361 = vpop.f32.mrb[0].mxu0
    %v362 = vadd.f32 0.0, %v361
    %v363 = vpop.f32.mrb[0].mxu0
    %364 = vmatprep.mubr.f32.mxu0 0.0
    %365 = vmatmul.mubr.f32.gmra.mrb[0].mxu0 %v279
    %v366 = vpop.f32.mrb[0].mxu0
    %v367 = vadd.f32 0.0, %v366
    %v368 = vpop.f32.mrb[0].mxu0
    %369 = vdwg.mxu0
    %v370 = vmul.f32 %v252, %v347
    %v371 = vmul.f32 %v257, %v352
    %v372 = vmul.f32 %v262, %v357
    %v373 = vmul.f32 %v267, %v362
    %v374 = vmul.f32 %v272, %v367
    %v375 = vadd.f32 %v370, %v371
    %v376 = vadd.f32 %v375, %v372
    %v377 = vadd.f32 %v376, %v373
    %v378 = vadd.f32 %v377, %v374
    %v379 = vrot.slane %v378, 4
    %v380 = vadd.f32 %v378, %v379
    %v381 = vrot.slane %v380, 2
    %v382 = vadd.f32 %v380, %v381
    %v383 = vrot.slane %v382, 1
    %v384 = vadd.f32 %v382, %v383
    %v385 = vsub.f32 0.0, %v384
    %v386 = vmul.f32 %v385, 1.442695
    %v387 = vpow.pop %v386
    %v388 = vadd.f32 %v387, 1.0
    %v389 = vrcp.pop %v388
    %390 = vst [vmem:[#allocation8] sm:$0x1] %v389
    // Predicated region
    $region30: #{tpu_custom_call.1} parent=1 // pred_check
      _
    $region31: #{tpu_custom_call.1} parent=1 // pred_check_branch
      %392 = sbr.rel (0) target = $region33
    $region32: #{tpu_custom_call.1} parent=1 // pred_region
      %s394 = ssub.s32 16, 16
      %395 = vsyncadd [#allocation4], %s394
      %s397 = sshll.u32 [#allocation8], 4
      %s398 = int_to_ptr.vmem [resolvable:$true] %s397
      %400 = dma.vmem_to_hbm [thread:$0]  %s398, 16, %s4, [#allocation4]
    $region33: #{tpu_custom_call.1} parent=1 // pred_fallthru
      _
    // Predicated region
    $region34: #{tpu_custom_call.1} parent=1 // pred_check
      _
    $region35: #{tpu_custom_call.1} parent=1 // pred_check_branch
      %402 = sbr.rel (0) target = $region37
    $region36: #{tpu_custom_call.1} parent=1 // pred_region
      %403 = dma.done [#allocation4], 16
    $region37: #{tpu_custom_call.1} parent=1 // pred_fallthru
      _
    %404 = vsyncpa [#allocation3], 1
    %405 = vsyncpa [#allocation6], 1
    %406 = vsyncpa [#allocation4], 1

</llo_original>
